<compile_context>
chip_gen: v6e
topology: v6e:2x2x1
jax: 0.10.0
libtpu: 0.0.40
codegen_flags: <defaults>
</compile_context>

<pallas_src>
import math

import jax
import jax.numpy as jnp
from jax.experimental import pallas as pl
from jax.experimental.pallas import tpu as pltpu

_LANE = 128


def _split_relu_kernel(x_ref, o_ref):
    """Writes relu(x) when grid axis 2 == 0, relu(-x) when it == 1."""
    half = pl.program_id(2)

    @pl.when(half == 0)
    def _():
        o_ref[...] = jnp.maximum(x_ref[...], jnp.zeros((), x_ref.dtype))

    @pl.when(half == 1)
    def _():
        o_ref[...] = jnp.maximum(-x_ref[...], jnp.zeros((), x_ref.dtype))


def _min_rows_for(itemsize: int) -> int:
    # Native sublane packing: f32 -> 8, bf16/f16 -> 16, int8/fp8 -> 32.
    return {4: 8, 2: 16, 1: 32}.get(itemsize, 8)


def _choose_tiles(outer: int, inner: int, itemsize: int, vmem_budget: int):
    """Pick (row_tile, inner_tile, grid_i, grid_j) under a VMEM byte budget."""
    min_rows = _min_rows_for(itemsize)

    # 2 double-buffered input blocks + 2 double-buffered output blocks, all of
    # size row_tile*inner_tile*itemsize  ->  total = 4 * block_bytes.
    max_block_bytes = max(vmem_budget // 4, min_rows * _LANE * itemsize)
    target_block_bytes = min(4 << 20, max_block_bytes)  # ~4 MiB streaming sweet spot

    # Lane (inner) tile: a multiple of 128 that divides `inner` exactly, so the
    # relu(-x) half starts on a block boundary of the (outer, 2*inner) output.
    lane_cap = max(_LANE, (target_block_bytes // (min_rows * itemsize)) // _LANE * _LANE)
    candidates = [c for c in range(_LANE, min(inner, lane_cap) + 1, _LANE)
                  if inner % c == 0]
    inner_tile = max(candidates) if candidates else inner
    # TODO(synk): when `inner` is not a multiple of 128 (e.g. split on a minor
    # axis with tiny W) we fall back to a single, possibly masked-store column
    # block; fine for typical NCHW activations where inner = C*H*W % 128 == 0.

    # Sublane (row) tile: fill the byte budget.
    if outer <= min_rows:
        row_tile = outer                       # block == full dim -> always legal
    else:
        rows = max(target_block_bytes // (inner_tile * itemsize), min_rows)
        row_tile = min(rows, outer)
        row_tile = max(min_rows, (row_tile // min_rows) * min_rows)

    def _grids(rt, it):
        return -(-outer // rt), inner // it    # inner_tile always divides inner

    gi, gj = _grids(row_tile, inner_tile)

    # Guarantee >= 2 parallel grid steps (v7x has 2 TensorCores sharing the work).
    if gi * gj < 2:
        if outer >= 2 * min_rows and row_tile >= 2 * min_rows:
            row_tile = max(min_rows, ((row_tile // 2) // min_rows) * min_rows)
        else:
            smaller = [c for c in candidates if c <= inner_tile // 2]
            if smaller:
                inner_tile = max(smaller)
        gi, gj = _grids(row_tile, inner_tile)

    return row_tile, inner_tile, gi, gj


def split_relu(x: jax.Array, split: int = 1) -> jax.Array:
    """Pallas TPU implementation of torch.cat([relu(x), relu(-x)], dim=split)."""
    shape = x.shape
    split = split % x.ndim                     # allow negative dims like torch
    outer = math.prod(shape[:split])
    inner = math.prod(shape[split:])
    itemsize = jnp.dtype(x.dtype).itemsize

    # Per-generation VMEM budget (v5e/v6e: 128 MiB, v7x: 64 MiB per TC).
    try:
        vmem_cap = int(pltpu.get_tpu_info().vmem_capacity_bytes)
    except Exception:
        vmem_cap = 64 << 20                    # conservative (v7x-sized) default
    vmem_budget = min(vmem_cap // 2, 64 << 20)

    row_tile, inner_tile, gi, gj = _choose_tiles(outer, inner, itemsize, vmem_budget)

    x2d = x.reshape(outer, inner)              # zero-copy view

    needed = 4 * row_tile * inner_tile * itemsize          # in+out, double-buffered
    vmem_limit = int(min(max(needed + (4 << 20), 32 << 20),
                         max(vmem_cap - (2 << 20), 32 << 20)))

    n_elems = outer * inner
    out2d = pl.pallas_call(
        _split_relu_kernel,
        out_shape=jax.ShapeDtypeStruct((outer, 2 * inner), x.dtype),
        grid=(gi, gj, 2),
        in_specs=[pl.BlockSpec((row_tile, inner_tile),
                               lambda i, j, s: (i, j))],
        out_specs=pl.BlockSpec((row_tile, inner_tile),
                               lambda i, j, s, _gj=gj: (i, s * _gj + j)),
        compiler_params=pltpu.CompilerParams(
            dimension_semantics=("parallel", "parallel", "arbitrary"),
            vmem_limit_bytes=vmem_limit),
        cost_estimate=pl.CostEstimate(
            flops=2 * n_elems, transcendentals=0,
            bytes_accessed=3 * n_elems * itemsize),
    )(x2d)

    # Zero-copy reshape: (outer, 2*inner) row-major IS the concat along `split`.
    out_shape = shape[:split] + (2 * shape[split],) + shape[split + 1:]
    return out2d.reshape(out_shape)


if __name__ == "__main__":
    # SplitRelu() default: split=1 (channel dim of an NCHW activation).
    B, C, H, W = 2, 4, 16, 16
    key = jax.random.PRNGKey(0)
    x = jax.random.normal(key, (B, C, H, W), dtype=jnp.float32)

    out = jax.block_until_ready(split_relu(x, split=1))
    ref = jnp.concatenate([jnp.maximum(x, 0.0), jnp.maximum(-x, 0.0)], axis=1)
    assert out.shape == (B, 2 * C, H, W), out.shape
    assert bool(jnp.array_equal(out, ref)), \
        f"max abs err = {float(jnp.max(jnp.abs(out - ref)))}"

    # bf16 + a different split axis exercises the dtype-aware tiler.
    xb = x.astype(jnp.bfloat16)
    outb = jax.block_until_ready(split_relu(xb, split=2))
    refb = jnp.concatenate([jnp.maximum(xb, 0), jnp.maximum(-xb, 0)], axis=2)
    assert outb.shape == (B, C, 2 * H, W), outb.shape
    assert bool(jnp.array_equal(outb, refb))

    print("KERNEL_OK")
</pallas_src>

<mosaic_0001>
module attributes {stable_mosaic.version = 11 : i64} {
  func.func @_split_relu_kernel(%arg0: i32, %arg1: i32, %arg2: i32, %arg3: memref<2x512xf32, #tpu.memory_space<vmem>>, %arg4: memref<2x512xf32, #tpu.memory_space<vmem>>) attributes {dimension_semantics = [#tpu.dimension_semantics<parallel>, #tpu.dimension_semantics<parallel>, #tpu.dimension_semantics<arbitrary>], iteration_bounds = array<i64: 1, 2, 2>, scalar_prefetch = 0 : i64, scratch_operands = 0 : i64, tpu.core_type = #tpu.core_type<tc>, window_params = [{transform_indices = @transform_0, window_bounds = array<i64: 2, 512>}, {transform_indices = @transform_1, window_bounds = array<i64: 2, 512>}]} {
    %c0_i32 = arith.constant 0 : i32
    %0 = arith.cmpi eq, %arg2, %c0_i32 : i32
    %1 = arith.extui %0 : i1 to i32
    %c0_i32_0 = arith.constant 0 : i32
    %2 = arith.cmpi ne, %1, %c0_i32_0 : i32
    scf.if %2 {
      %c0 = arith.constant 0 : index
      %c0_2 = arith.constant 0 : index
      %6 = vector.load %arg3[%c0, %c0_2] : memref<2x512xf32, #tpu.memory_space<vmem>>, vector<2x512xf32>
      %cst = arith.constant 0.000000e+00 : f32
      %7 = vector.broadcast %cst : f32 to vector<2x512xf32>
      %8 = arith.maximumf %6, %7 : vector<2x512xf32>
      %c0_3 = arith.constant 0 : index
      %c0_4 = arith.constant 0 : index
      %9 = vector.load %arg4[%c0_3, %c0_4] : memref<2x512xf32, #tpu.memory_space<vmem>>, vector<2x512xf32>
      tpu.vector_store %arg4[%c0_3, %c0_4], %8 {strides = array<i32>} : memref<2x512xf32, #tpu.memory_space<vmem>>, vector<2x512xf32>,
    } else {
    }
    %c1_i32 = arith.constant 1 : i32
    %3 = arith.cmpi eq, %arg2, %c1_i32 : i32
    %4 = arith.extui %3 : i1 to i32
    %c0_i32_1 = arith.constant 0 : i32
    %5 = arith.cmpi ne, %4, %c0_i32_1 : i32
    scf.if %5 {
      %c0 = arith.constant 0 : index
      %c0_2 = arith.constant 0 : index
      %6 = vector.load %arg3[%c0, %c0_2] : memref<2x512xf32, #tpu.memory_space<vmem>>, vector<2x512xf32>
      %cst = arith.constant 0.000000e+00 : f32
      %7 = vector.broadcast %cst : f32 to vector<2x512xf32>
      %8 = arith.subf %7, %6 : vector<2x512xf32>
      %cst_3 = arith.constant 0.000000e+00 : f32
      %9 = vector.broadcast %cst_3 : f32 to vector<2x512xf32>
      %10 = arith.maximumf %8, %9 : vector<2x512xf32>
      %c0_4 = arith.constant 0 : index
      %c0_5 = arith.constant 0 : index
      %11 = vector.load %arg4[%c0_4, %c0_5] : memref<2x512xf32, #tpu.memory_space<vmem>>, vector<2x512xf32>
      tpu.vector_store %arg4[%c0_4, %c0_5], %10 {strides = array<i32>} : memref<2x512xf32, #tpu.memory_space<vmem>>, vector<2x512xf32>,
    } else {
    }
    return
  }
  func.func @transform_0(%arg0: i32, %arg1: i32, %arg2: i32) -> (i32, i32) {
    %c0_i32 = arith.constant 0 : i32
    return %arg0, %arg1 : i32, i32
  }
  func.func @transform_1(%arg0: i32, %arg1: i32, %arg2: i32) -> (i32, i32) {
    %c2_i32 = arith.constant 2 : i32
    %0 = arith.muli %arg2, %c2_i32 : i32
    %1 = arith.addi %0, %arg1 : i32
    %c0_i32 = arith.constant 0 : i32
    return %arg0, %1 : i32, i32
  }
}

</mosaic_0001>

<llo_original>
// kernel: tpu_custom_call.1
$region0: #{tpu_custom_call.1}
  #allocation0 [shape = 'u32[]', space=smem, size = 0x4, offset = 0x4, fixed_abs, tag = 'smem constant byte address 0x4 - core index']
  #allocation1 [shape = 'u32[144,128]{1,0:T(1,128)}', space=vmem, size = 0x12000, scoped, tag = 'internal scratch']
  %s0 = inlined_call_operand.hbm [shape: f32[2,1024], index: 0, kind: input, shape index: {}]
  %s1 = inlined_call_operand.hbm [shape: f32[2,2048], index: 1, kind: output, shape index: {}]
  %s2 = sld [smem:[#allocation0]]
  $region49: #{tpu_custom_call.1} parent=0
    _
  %s4 = ssub.s32 1, %s2
  %s5 = scalar_select 0, %s4, %s2
  $region1: #{tpu_custom_call.1} parent=0
    #allocation2 [shape = 'u8[8192]{0}', space=vmem, size = 0x2000, scoped, tag = 'input window, operand 0']
    #allocation3 [shape = 's32[2]{0}', space=sflag, size = 0x8, scoped, tag = 'scoped memory for tpu_custom_call.1']
    #allocation4 [shape = 's32[2]{0}', space=sflag, size = 0x8, scoped, tag = 'scoped memory for tpu_custom_call.1']
    #allocation5 [shape = 'u8[8192]{0}', space=vmem, size = 0x2000, scoped, tag = 'output window, operand 0']
    %6 = vsyncpa [#allocation3], 0
    %s7 = scalar_lea.sflag [#allocation3], 1
    %8 = vsyncpa %s7, 0
    %9 = vsyncpa [#allocation4], 0
    %s10 = scalar_lea.sflag [#allocation4], 1
    %11 = vsyncpa %s10, 0
    loop: start=0, step=1, limit=6
    $region2: #{tpu_custom_call.1} parent=1 // loop_pre_header
      _
    $region3: #{tpu_custom_call.1} parent=1 // loop_header
      %s13 = sphi 0, %s17
      %p14 = scmp.ge.s32.totalorder %s13, 6
      %s20 = sphi 0, %s39
      %s21 = sphi 0, %s35
      %s22 = sphi 0, %s31
      %s23 = sphi 0, %s20
      %s24 = sphi 0, %s21
      %s25 = sphi 0, %s22
      %s26 = sphi 0, %s23
      %s27 = sphi 0, %s24
      %s28 = sphi 0, %s25
      %s44 = sphi 0, %s46
      %s47 = sphi 0, %s44
      %s48 = sphi 0, %s47
      %s64 = sphi 0, %s48
      %s76 = sphi 0, %s78
      %s79 = sphi 0, %s76
      %s80 = sphi 0, %s79
      %s96 = sphi 0, %s80
    $region4: #{tpu_custom_call.1} parent=1 // loop_header_branch
      %16 = sbr.rel (%p14) target = $region8
    $region5: #{tpu_custom_call.1} parent=1 // loop_body
      %s18 = ssub.s32 %s13, 1
      %s19 = ssub.s32 %s13, 2
      %s29 = sadd.s32 1, %s22
      %p30 = scmp.ge.s32.totalorder %s29, 2
      %s31 = scalar_select %p30, 0, %s29
      %s32 = sadd.s32 1, %s21
      %s33 = scalar_select %p30, %s32, %s21
      %p34 = scmp.ge.s32.totalorder %s33, 2
      %s35 = scalar_select %p34, 0, %s33
      %s36 = sadd.s32 1, %s20
      %s37 = scalar_select %p34, %s36, %s20
      %p38 = scmp.ge.s32.totalorder %s37, 1
      %s39 = scalar_select %p38, 0, %s37
      %s40 = ssub.s32 %s20, %s39
      %s41 = ssub.s32 %s21, %s35
      %s42 = sor.u32 %s40, %s41
      %p43 = scmp.eq.s32.totalorder %s42, 0
      %s45 = sadd.s32 %s44, 1
      %s46 = scalar_select %p43, %s44, %s45
      %p49 = pneg %p43
      %p50 = scmp.eq.s32.totalorder %s13, 3
      %p51 = por %p49, %p50
      %p52 = scmp.ne.s32.totalorder %s44, %s47
      %p53 = scmp.eq.s32.totalorder %s13, 0
      %p54 = por %p52, %p53
      %p55 = scmp.ne.s32.totalorder %s44, %s47
      %p56 = scmp.eq.s32.totalorder %s18, 3
      %p57 = por %p55, %p56
      %p58 = scmp.ne.s32.totalorder %s47, %s48
      %p59 = scmp.eq.s32.totalorder %s18, 0
      %p60 = por %p58, %p59
      %p61 = scmp.ne.s32.totalorder %s47, %s48
      %p62 = scmp.eq.s32.totalorder %s19, 3
      %p63 = por %p61, %p62
      %p65 = scmp.ne.s32.totalorder %s48, %s64
      %p66 = scmp.eq.s32.totalorder %s19, 0
      %p67 = por %p65, %p66
      %s68 = smul.u32 %s22, 2
      %s69 = sadd.s32 %s68, %s21
      %s70 = smul.u32 %s31, 2
      %s71 = sadd.s32 %s70, %s35
      %s72 = ssub.s32 %s20, %s39
      %s73 = ssub.s32 %s69, %s71
      %s74 = sor.u32 %s72, %s73
      %p75 = scmp.eq.s32.totalorder %s74, 0
      %s77 = sadd.s32 %s76, 1
      %s78 = scalar_select %p75, %s76, %s77
      %p81 = pneg %p75
      %p82 = scmp.eq.s32.totalorder %s13, 3
      %p83 = por %p81, %p82
      %p84 = scmp.ne.s32.totalorder %s76, %s79
      %p85 = scmp.eq.s32.totalorder %s13, 0
      %p86 = por %p84, %p85
      %p87 = scmp.ne.s32.totalorder %s76, %s79
      %p88 = scmp.eq.s32.totalorder %s18, 3
      %p89 = por %p87, %p88
      %p90 = scmp.ne.s32.totalorder %s79, %s80
      %p91 = scmp.eq.s32.totalorder %s18, 0
      %p92 = por %p90, %p91
      %p93 = scmp.ne.s32.totalorder %s79, %s80
      %p94 = scmp.eq.s32.totalorder %s19, 3
      %p95 = por %p93, %p94
      %p97 = scmp.ne.s32.totalorder %s80, %s96
      %p98 = scmp.eq.s32.totalorder %s19, 0
      %p99 = por %p97, %p98
      %p100 = scmp.le.s32.totalorder 1, %s13
      %p101 = scmp.lt.s32.totalorder %s13, 5
      %p102 = pnand %p100, %p101
      %p103 = pneg %p102
      // Predicated region
      $region9: #{tpu_custom_call.1} parent=5 // pred_check
        _
      $region10: #{tpu_custom_call.1} parent=5 // pred_check_branch
        %105 = sbr.rel (%p102) target = $region12
      $region11: #{tpu_custom_call.1} parent=5 // pred_region
        %s106 = ssub.s32 %s13, 1
      $region12: #{tpu_custom_call.1} parent=5 // pred_fallthru
        _
      %p107 = scmp.lt.s32.totalorder %s13, 4
      // Predicated region
      $region13: #{tpu_custom_call.1} parent=5 // pred_check
        %p108 = pneg %p107
      $region14: #{tpu_custom_call.1} parent=5 // pred_check_branch
        %110 = sbr.rel (%p108) target = $region16
      $region15: #{tpu_custom_call.1} parent=5 // pred_region
        // Predicated region
        $region17: #{tpu_custom_call.1} parent=15 // pred_check
          %p111 = pneg %p54
        $region18: #{tpu_custom_call.1} parent=15 // pred_check_branch
          %113 = sbr.rel (%p111) target = $region20
        $region19: #{tpu_custom_call.1} parent=15 // pred_region
          %s114 = sand.u32 %s44, 1
          %s115 = scalar_lea.sflag [#allocation3], %s114
          %s116 = sand.u32 %s44, 1
          %s117 = smul.addr %s116, 8
          %s118 = scalar_lea.vmem [#allocation2], %s117
          %s119 = smul.u32 4, %s21
          %s121 = ssub.s32 128, 128
          %122 = vsyncadd %s115, %s121
          %s123 = smul.addr %s20, 8
          %s124 = sadd.s32 %s119, %s123
          %s125 = smul.addr %s124, 32
          %s126 = scalar_lea.hbm %s0, %s125
          %s128 = sshll.u32 %s118, 4
          %s129 = int_to_ptr.vmem [resolvable:$true] %s128
          %131 = dma.hbm_to_vmem [thread:$0]  %s126, 128, %s129, %s115
        $region20: #{tpu_custom_call.1} parent=15 // pred_fallthru
          _
      $region16: #{tpu_custom_call.1} parent=5 // pred_fallthru
        _
      %p132 = scmp.le.s32.totalorder 1, %s13
      %p133 = scmp.lt.s32.totalorder %s13, 5
      %p134 = pnand %p132, %p133
      %p135 = pneg %p134
      // Predicated region
      $region21: #{tpu_custom_call.1} parent=5 // pred_check
        _
      $region22: #{tpu_custom_call.1} parent=5 // pred_check_branch
        %137 = sbr.rel (%p134) target = $region24
      $region23: #{tpu_custom_call.1} parent=5 // pred_region
        %s138 = ssub.s32 %s13, 1
        %s139 = sand.u32 %s47, 1
        %s140 = scalar_lea.sflag [#allocation3], %s139
        %s141 = sand.u32 %s47, 1
        %s142 = smul.addr %s141, 8
        %s143 = scalar_lea.vmem [#allocation2], %s142
        // Predicated region
        $region25: #{tpu_custom_call.1} parent=23 // pred_check
          %p144 = pneg %p60
        $region26: #{tpu_custom_call.1} parent=23 // pred_check_branch
          %146 = sbr.rel (%p144) target = $region28
        $region27: #{tpu_custom_call.1} parent=23 // pred_region
          %147 = dma.done %s140, 128
        $region28: #{tpu_custom_call.1} parent=23 // pred_fallthru
          _
        %s148 = sand.u32 %s47, 1
        %s149 = scalar_lea.sflag [#allocation3], %s148
        %s150 = sand.u32 %s47, 1
        %s151 = smul.addr %s150, 8
        %s152 = scalar_lea.vmem [#allocation2], %s151
        %p153 = pneg %p60
        %p154 = pneg %p57
        %p155 = pneg %p92
        %p156 = pneg %p89
        %s157 = sand.u32 %s79, 1
        %s158 = scalar_lea.sflag [#allocation4], %s157
        %s159 = sand.u32 %s79, 1
        %s160 = smul.addr %s159, 8
        %s161 = scalar_lea.vmem [#allocation5], %s160
        %s162 = smul.u32 4, %s24
        %s163 = smul.u32 %s25, 2
        %s164 = sadd.s32 %s163, %s24
        %s165 = smul.u32 4, %s164
        %p166 = scmp.eq.s32.totalorder %s25, 0
        // Predicated region
        $region29: #{tpu_custom_call.1} parent=23 // pred_check
          %p167 = pneg %p166
        $region30: #{tpu_custom_call.1} parent=23 // pred_check_branch
          %169 = sbr.rel (%p167) target = $region32
        $region31: #{tpu_custom_call.1} parent=23 // pred_region
          %v170 = vld [vmem:[%s143] sm:$0xff]
          %v171 = vmax.f32 %v170, 0.0
          %172 = vst [vmem:[%s161] sm:$0xff] %v171
        $region32: #{tpu_custom_call.1} parent=23 // pred_fallthru
          _
        %p173 = scmp.eq.s32.totalorder %s25, 1
        // Predicated region
        $region33: #{tpu_custom_call.1} parent=23 // pred_check
          %p174 = pneg %p173
        $region34: #{tpu_custom_call.1} parent=23 // pred_check_branch
          %176 = sbr.rel (%p174) target = $region36
        $region35: #{tpu_custom_call.1} parent=23 // pred_region
          %v177 = vld [vmem:[%s143] sm:$0xff]
          %v178 = vsub.f32 0.0, %v177
          %v179 = vmax.f32 %v178, 0.0
          %180 = vst [vmem:[%s161] sm:$0xff] %v179
        $region36: #{tpu_custom_call.1} parent=23 // pred_fallthru
          _
        %s181 = sand.u32 %s79, 1
        %s182 = scalar_lea.sflag [#allocation4], %s181
        %s183 = sand.u32 %s79, 1
        %s184 = smul.addr %s183, 8
        %s185 = scalar_lea.vmem [#allocation5], %s184
        // Predicated region
        $region37: #{tpu_custom_call.1} parent=23 // pred_check
          %p186 = pneg %p89
        $region38: #{tpu_custom_call.1} parent=23 // pred_check_branch
          %188 = sbr.rel (%p186) target = $region40
        $region39: #{tpu_custom_call.1} parent=23 // pred_region
          %s189 = smul.u32 %s25, 2
          %s190 = sadd.s32 %s189, %s24
          %s191 = smul.u32 4, %s190
          %s193 = ssub.s32 128, 128
          %194 = vsyncadd %s182, %s193
          %s195 = smul.addr %s23, 16
          %s196 = sadd.s32 %s191, %s195
          %s197 = smul.addr %s196, 32
          %s198 = scalar_lea.hbm %s1, %s197
          %s200 = sshll.u32 %s185, 4
          %s201 = int_to_ptr.vmem [resolvable:$true] %s200
          %203 = dma.vmem_to_hbm [thread:$0]  %s201, 128, %s198, %s182
        $region40: #{tpu_custom_call.1} parent=23 // pred_fallthru
          _
      $region24: #{tpu_custom_call.1} parent=5 // pred_fallthru
        _
      %p204 = scmp.le.s32.totalorder 2, %s13
      // Predicated region
      $region41: #{tpu_custom_call.1} parent=5 // pred_check
        %p205 = pneg %p204
      $region42: #{tpu_custom_call.1} parent=5 // pred_check_branch
        %207 = sbr.rel (%p205) target = $region44
      $region43: #{tpu_custom_call.1} parent=5 // pred_region
        %s208 = ssub.s32 %s13, 2
        // Predicated region
        $region45: #{tpu_custom_call.1} parent=43 // pred_check
          %p209 = pneg %p95
        $region46: #{tpu_custom_call.1} parent=43 // pred_check_branch
          %211 = sbr.rel (%p209) target = $region48
        $region47: #{tpu_custom_call.1} parent=43 // pred_region
          %s212 = sand.u32 %s80, 1
          %s213 = scalar_lea.sflag [#allocation4], %s212
          %s214 = sand.u32 %s80, 1
          %s215 = smul.addr %s214, 8
          %s216 = scalar_lea.vmem [#allocation5], %s215
          %217 = dma.done %s213, 128
        $region48: #{tpu_custom_call.1} parent=43 // pred_fallthru
          _
      $region44: #{tpu_custom_call.1} parent=5 // pred_fallthru
        _
    $region6: #{tpu_custom_call.1} parent=1 // loop_footer
      %s17 = sadd.s32 1, %s13
    $region7: #{tpu_custom_call.1} parent=1 // loop_footer_branch
      %12 = sbr.rel target = $region3
    $region8: #{tpu_custom_call.1} parent=1 // loop_exit
      _
    %218 = vsyncpa [#allocation3], 1
    %s219 = scalar_lea.sflag [#allocation3], 1
    %220 = vsyncpa %s219, 1
    %221 = vsyncpa [#allocation4], 1
    %s222 = scalar_lea.sflag [#allocation4], 1
    %223 = vsyncpa %s222, 1

</llo_original>
